<compile_context>
chip_gen: v5e
topology: v5e:2x2
jax: 0.10.0
libtpu: 0.0.40
codegen_flags: <defaults>
</compile_context>

<pallas_src>
import jax
import jax.numpy as jnp
from jax.experimental import pallas as pl
from jax.experimental.pallas import tpu as pltpu


LANE = 128     # vreg / MXU lane width
SUBLANE = 8    # vreg sublane count


def _round_up(x, m):
    return (x + m - 1) // m * m


def _vmem_capacity_bytes():
    """Physical VMEM of the current TPU generation (conservative fallback)."""
    try:
        cap = getattr(pltpu.get_tpu_info(), "vmem_capacity_bytes", None)
        if cap:
            return int(cap)
    except Exception:
        pass
    return 64 << 20  # v7x per-TensorCore VMEM; safe lower bound everywhere


def mlp_kernel(x_ref, w1_ref, b1_ref, w2_ref, b2_ref, w3_ref, b3_ref, o_ref):
    # MXU feed dtype follows the (pre-cast) weights: bf16 by default.
    cdt = w1_ref.dtype
    # In-kernel cast of x (VPU work, hidden under the DMA pipeline).
    x = x_ref[...].astype(cdt)
    # Layer 1: MXU matmul, f32 accumulate, bias + ReLU in f32.
    h = jnp.dot(x, w1_ref[...], preferred_element_type=jnp.float32)
    h = jnp.maximum(h + b1_ref[...], 0.0)
    # Layer 2.
    h = jnp.dot(h.astype(cdt), w2_ref[...], preferred_element_type=jnp.float32)
    h = jnp.maximum(h + b2_ref[...], 0.0)
    # Layer 3: Linear, no activation.
    out = jnp.dot(h.astype(cdt), w3_ref[...], preferred_element_type=jnp.float32)
    o_ref[...] = (out + b3_ref[...]).astype(o_ref.dtype)


def prepare_params(w1, b1, w2, b2, w3, b3, *, use_bf16=True):
    """Pad the hidden dim to a lane multiple & cast weights ONCE; reuse across calls.

    Zero-padding is exact for matmul / bias / ReLU, so results are unchanged.
    """
    H = w1.shape[1]
    H_p = _round_up(H, LANE)
    w_dtype = jnp.bfloat16 if use_bf16 else jnp.float32
    w1p = jnp.pad(w1, ((0, 0), (0, H_p - H))).astype(w_dtype)
    w2p = jnp.pad(w2, ((0, H_p - H), (0, H_p - H))).astype(w_dtype)
    w3p = jnp.pad(w3, ((0, H_p - H), (0, 0))).astype(w_dtype)
    b1p = jnp.pad(b1.reshape(1, -1), ((0, 0), (0, H_p - H))).astype(jnp.float32)
    b2p = jnp.pad(b2.reshape(1, -1), ((0, 0), (0, H_p - H))).astype(jnp.float32)
    b3p = b3.reshape(1, -1).astype(jnp.float32)
    return (w1p, b1p, w2p, b2p, w3p, b3p)


def _vmem_need(tile_b, in_dim, H_p, C, x_isize, w_isize, out_isize, weight_bufs):
    tiles = 2 * tile_b * (in_dim * x_isize + C * out_isize)          # x / out (2-buf)
    weights = weight_bufs * ((in_dim * H_p + H_p * H_p + H_p * C) * w_isize
                             + (2 * H_p + C) * 4)                    # resident params
    interm = 2 * tile_b * H_p * 4                                    # live f32 h tiles
    return tiles + weights + interm + (2 << 20)                      # headroom


def _build_forward(Bp, in_dim, H_p, C, tile_b, out_dtype, vmem_bytes, cost,
                   single_buffer_weights):
    resident = {}
    if single_buffer_weights:
        # Constant index_map -> double-buffering buys nothing; halve footprint.
        resident = dict(pipeline_mode=pl.Buffered(1))

    def const(i):
        return (0, 0)

    in_specs = [
        pl.BlockSpec((tile_b, in_dim), lambda i: (i, 0)),   # x: full feature dim
        pl.BlockSpec((in_dim, H_p), const, **resident),
        pl.BlockSpec((1, H_p), const, **resident),
        pl.BlockSpec((H_p, H_p), const, **resident),
        pl.BlockSpec((1, H_p), const, **resident),
        pl.BlockSpec((H_p, C), const, **resident),
        pl.BlockSpec((1, C), const, **resident),
    ]
    return pl.pallas_call(
        mlp_kernel,
        out_shape=jax.ShapeDtypeStruct((Bp, C), out_dtype),
        grid_spec=pltpu.PrefetchScalarGridSpec(
            num_scalar_prefetch=0,
            grid=(Bp // tile_b,),
            in_specs=in_specs,
            out_specs=pl.BlockSpec((tile_b, C), lambda i: (i, 0)),  # full cut_dim
        ),
        compiler_params=pltpu.CompilerParams(
            dimension_semantics=("parallel",),  # batch tiles independent (v7x 2-TC)
            vmem_limit_bytes=vmem_bytes,
        ),
        cost_estimate=cost,
    )


def mlp_feature_extractor(x, params, *, tile_b=None, out_dtype=None):
    """Fused 3-layer MLP forward: relu(relu(x@w1+b1)@w2+b2)@w3 + b3.

    `params` must come from prepare_params() (hidden dim pre-padded, pre-cast).
    """
    w1p, b1p, w2p, b2p, w3p, b3p = params
    B, in_dim = x.shape
    H_p = w1p.shape[1]
    C = w3p.shape[1]
    out_dtype = x.dtype if out_dtype is None else out_dtype

    x_isize = jnp.dtype(x.dtype).itemsize
    w_isize = jnp.dtype(w1p.dtype).itemsize
    out_isize = jnp.dtype(out_dtype).itemsize

    budget_cap = (_vmem_capacity_bytes() * 3) // 4  # headroom for Mosaic internals

    # Batch tile: large (up to 1024 rows) to amortize per-step overhead on
    # 128 MiB-VMEM parts, shrunk until everything fits the per-generation cap.
    if tile_b is None:
        if B >= 2048:
            tile_b = 1024
        elif B >= 512:
            tile_b = 512
        elif B >= 128:
            tile_b = 128
        else:
            tile_b = _round_up(B, SUBLANE)
        while (tile_b > SUBLANE
               and _vmem_need(tile_b, in_dim, H_p, C,
                              x_isize, w_isize, out_isize, 2) > budget_cap):
            tile_b //= 2
        tile_b = max(_round_up(tile_b, SUBLANE), SUBLANE)
    Bp = _round_up(B, tile_b)

    # Only batch padding (and only when needed); feature dim stays untouched.
    xb = x if Bp == B else jnp.pad(x, ((0, Bp - B), (0, 0)))

    flops = 2 * Bp * (in_dim * H_p + H_p * H_p + H_p * C)
    bytes_accessed = (Bp * in_dim * x_isize
                      + (w1p.size + w2p.size + w3p.size) * w_isize
                      + (b1p.size + b2p.size + b3p.size) * 4
                      + Bp * C * out_isize)
    cost = pl.CostEstimate(flops=flops, transcendentals=0,
                           bytes_accessed=bytes_accessed)

    def run(weight_bufs, single_buffer):
        need = _vmem_need(tile_b, in_dim, H_p, C,
                          x_isize, w_isize, out_isize, weight_bufs)
        vmem_bytes = int(min(max(need + (4 << 20), 16 << 20), budget_cap))
        # TODO(synk): if resident weights alone exceed the VMEM cap (very large
        # hidden_dim), tile w2 over an extra grid axis instead of clamping.
        fwd = _build_forward(Bp, in_dim, H_p, C, tile_b, out_dtype, vmem_bytes,
                             cost, single_buffer)
        return fwd(xb, w1p, b1p, w2p, b2p, w3p, b3p)

    try:
        out_p = run(1, True)       # single-buffered resident weights
    except Exception:
        out_p = run(2, False)      # fallback: default double-buffering

    return out_p if Bp == B else out_p[:B]


def init_params(key, input_size, cut_dim, hidden_dim, dtype=jnp.float32):
    """Synthetic init matching nn.Linear shapes (weights stored as (in, out))."""
    k1, k2, k3, k4, k5, k6 = jax.random.split(key, 6)
    s1 = 1.0 / jnp.sqrt(input_size)
    s2 = 1.0 / jnp.sqrt(hidden_dim)
    w1 = jax.random.uniform(k1, (input_size, hidden_dim), dtype, -s1, s1)
    b1 = jax.random.uniform(k2, (1, hidden_dim), dtype, -s1, s1)
    w2 = jax.random.uniform(k3, (hidden_dim, hidden_dim), dtype, -s2, s2)
    b2 = jax.random.uniform(k4, (1, hidden_dim), dtype, -s2, s2)
    w3 = jax.random.uniform(k5, (hidden_dim, cut_dim), dtype, -s2, s2)
    b3 = jax.random.uniform(k6, (1, cut_dim), dtype, -s2, s2)
    return w1, b1, w2, b2, w3, b3


if __name__ == "__main__":
    # Small shapes consistent with the module's forward: x is (batch, input_size).
    batch, input_size, hidden_dim, cut_dim = 8, 32, 32, 16

    key = jax.random.PRNGKey(0)
    kx, kp = jax.random.split(key)
    x = jax.random.normal(kx, (batch, input_size), jnp.float32)
    w1, b1, w2, b2, w3, b3 = init_params(kp, input_size, cut_dim, hidden_dim)

    # Pad/cast weights once (hoisted out of the per-call path), then run.
    params = prepare_params(w1, b1, w2, b2, w3, b3)
    out = mlp_feature_extractor(x, params)
    out = jax.block_until_ready(out)

    # Pure-JAX reference with the same bf16-feed / f32-accumulate arithmetic.
    xb = x.astype(jnp.bfloat16)
    h = jnp.maximum(jnp.dot(xb, w1.astype(jnp.bfloat16),
                            preferred_element_type=jnp.float32) + b1, 0.0)
    h = jnp.maximum(jnp.dot(h.astype(jnp.bfloat16), w2.astype(jnp.bfloat16),
                            preferred_element_type=jnp.float32) + b2, 0.0)
    ref = jnp.dot(h.astype(jnp.bfloat16), w3.astype(jnp.bfloat16),
                  preferred_element_type=jnp.float32) + b3

    assert out.shape == (batch, cut_dim), out.shape
    assert jnp.allclose(out, ref, atol=5e-3, rtol=5e-3), \
        float(jnp.max(jnp.abs(out - ref)))

    print("KERNEL_OK")
</pallas_src>

<mosaic_0001>
module attributes {stable_mosaic.version = 11 : i64} {
  func.func @mlp_kernel(%arg0: i32, %arg1: memref<8x32xf32, #tpu.memory_space<vmem>>, %arg2: memref<32x128xbf16, #tpu.memory_space<vmem>>, %arg3: memref<1x128xf32, #tpu.memory_space<vmem>>, %arg4: memref<128x128xbf16, #tpu.memory_space<vmem>>, %arg5: memref<1x128xf32, #tpu.memory_space<vmem>>, %arg6: memref<128x16xbf16, #tpu.memory_space<vmem>>, %arg7: memref<1x16xf32, #tpu.memory_space<vmem>>, %arg8: memref<8x16xf32, #tpu.memory_space<vmem>>) attributes {dimension_semantics = [#tpu.dimension_semantics<parallel>], iteration_bounds = array<i64: 1>, scalar_prefetch = 0 : i64, scratch_operands = 0 : i64, tpu.core_type = #tpu.core_type<tc>, window_params = [{transform_indices = @transform_0, window_bounds = array<i64: 8, 32>}, {pipeline_mode = #tpu.pipeline_mode<synchronous>, transform_indices = @transform_1, window_bounds = array<i64: 32, 128>}, {pipeline_mode = #tpu.pipeline_mode<synchronous>, transform_indices = @transform_2, window_bounds = array<i64: 1, 128>}, {pipeline_mode = #tpu.pipeline_mode<synchronous>, transform_indices = @transform_3, window_bounds = array<i64: 128, 128>}, {pipeline_mode = #tpu.pipeline_mode<synchronous>, transform_indices = @transform_4, window_bounds = array<i64: 1, 128>}, {pipeline_mode = #tpu.pipeline_mode<synchronous>, transform_indices = @transform_5, window_bounds = array<i64: 128, 16>}, {pipeline_mode = #tpu.pipeline_mode<synchronous>, transform_indices = @transform_6, window_bounds = array<i64: 1, 16>}, {transform_indices = @transform_7, window_bounds = array<i64: 8, 16>}]} {
    %c0 = arith.constant 0 : index
    %c0_0 = arith.constant 0 : index
    %0 = vector.load %arg1[%c0, %c0_0] : memref<8x32xf32, #tpu.memory_space<vmem>>, vector<8x32xf32>
    %1 = arith.truncf %0 : vector<8x32xf32> to vector<8x32xbf16>
    %c0_1 = arith.constant 0 : index
    %c0_2 = arith.constant 0 : index
    %2 = vector.load %arg2[%c0_1, %c0_2] : memref<32x128xbf16, #tpu.memory_space<vmem>>, vector<32x128xbf16>
    %cst = arith.constant dense<0.000000e+00> : vector<8x128xf32>
    %3 = tpu.matmul %1, %2, %cst {dimension_numbers = #tpu.dot_dimension_numbers<[1], [0], [0], [1], [0, 0, 1, 1], [], []>} : vector<8x32xbf16>, vector<32x128xbf16>, vector<8x128xf32> -> vector<8x128xf32>
    %c0_3 = arith.constant 0 : index
    %c0_4 = arith.constant 0 : index
    %4 = vector.load %arg3[%c0_3, %c0_4] : memref<1x128xf32, #tpu.memory_space<vmem>>, vector<1x128xf32>
    %5 = vector.broadcast %4 : vector<1x128xf32> to vector<8x128xf32>
    %6 = arith.addf %3, %5 : vector<8x128xf32>
    %cst_5 = arith.constant 0.000000e+00 : f32
    %7 = vector.broadcast %cst_5 : f32 to vector<8x128xf32>
    %8 = arith.maximumf %6, %7 : vector<8x128xf32>
    %9 = arith.truncf %8 : vector<8x128xf32> to vector<8x128xbf16>
    %c0_6 = arith.constant 0 : index
    %c0_7 = arith.constant 0 : index
    %10 = vector.load %arg4[%c0_6, %c0_7] : memref<128x128xbf16, #tpu.memory_space<vmem>>, vector<128x128xbf16>
    %cst_8 = arith.constant dense<0.000000e+00> : vector<8x128xf32>
    %11 = tpu.matmul %9, %10, %cst_8 {dimension_numbers = #tpu.dot_dimension_numbers<[1], [0], [0], [1], [0, 0, 1, 1], [], []>} : vector<8x128xbf16>, vector<128x128xbf16>, vector<8x128xf32> -> vector<8x128xf32>
    %c0_9 = arith.constant 0 : index
    %c0_10 = arith.constant 0 : index
    %12 = vector.load %arg5[%c0_9, %c0_10] : memref<1x128xf32, #tpu.memory_space<vmem>>, vector<1x128xf32>
    %13 = vector.broadcast %12 : vector<1x128xf32> to vector<8x128xf32>
    %14 = arith.addf %11, %13 : vector<8x128xf32>
    %cst_11 = arith.constant 0.000000e+00 : f32
    %15 = vector.broadcast %cst_11 : f32 to vector<8x128xf32>
    %16 = arith.maximumf %14, %15 : vector<8x128xf32>
    %17 = arith.truncf %16 : vector<8x128xf32> to vector<8x128xbf16>
    %c0_12 = arith.constant 0 : index
    %c0_13 = arith.constant 0 : index
    %18 = vector.load %arg6[%c0_12, %c0_13] : memref<128x16xbf16, #tpu.memory_space<vmem>>, vector<128x16xbf16>
    %cst_14 = arith.constant dense<0.000000e+00> : vector<8x16xf32>
    %19 = tpu.matmul %17, %18, %cst_14 {dimension_numbers = #tpu.dot_dimension_numbers<[1], [0], [0], [1], [0, 0, 1, 1], [], []>} : vector<8x128xbf16>, vector<128x16xbf16>, vector<8x16xf32> -> vector<8x16xf32>
    %c0_15 = arith.constant 0 : index
    %c0_16 = arith.constant 0 : index
    %20 = vector.load %arg7[%c0_15, %c0_16] : memref<1x16xf32, #tpu.memory_space<vmem>>, vector<1x16xf32>
    %21 = vector.broadcast %20 : vector<1x16xf32> to vector<8x16xf32>
    %22 = arith.addf %19, %21 : vector<8x16xf32>
    %c0_17 = arith.constant 0 : index
    %c0_18 = arith.constant 0 : index
    %23 = vector.load %arg8[%c0_17, %c0_18] : memref<8x16xf32, #tpu.memory_space<vmem>>, vector<8x16xf32>
    tpu.vector_store %arg8[%c0_17, %c0_18], %22 {strides = array<i32>} : memref<8x16xf32, #tpu.memory_space<vmem>>, vector<8x16xf32>,
    return
  }
  func.func @transform_0(%arg0: i32) -> (i32, i32) {
    %c0_i32 = arith.constant 0 : i32
    %c0_i32_0 = arith.constant 0 : i32
    return %arg0, %c0_i32 : i32, i32
  }
  func.func @transform_1(%arg0: i32) -> (i32, i32) {
    %c0_i32 = arith.constant 0 : i32
    %c0_i32_0 = arith.constant 0 : i32
    %c0_i32_1 = arith.constant 0 : i32
    return %c0_i32, %c0_i32_0 : i32, i32
  }
  func.func @transform_2(%arg0: i32) -> (i32, i32) {
    %c0_i32 = arith.constant 0 : i32
    %c0_i32_0 = arith.constant 0 : i32
    %c0_i32_1 = arith.constant 0 : i32
    return %c0_i32, %c0_i32_0 : i32, i32
  }
  func.func @transform_3(%arg0: i32) -> (i32, i32) {
    %c0_i32 = arith.constant 0 : i32
    %c0_i32_0 = arith.constant 0 : i32
    %c0_i32_1 = arith.constant 0 : i32
    return %c0_i32, %c0_i32_0 : i32, i32
  }
  func.func @transform_4(%arg0: i32) -> (i32, i32) {
    %c0_i32 = arith.constant 0 : i32
    %c0_i32_0 = arith.constant 0 : i32
    %c0_i32_1 = arith.constant 0 : i32
    return %c0_i32, %c0_i32_0 : i32, i32
  }
  func.func @transform_5(%arg0: i32) -> (i32, i32) {
    %c0_i32 = arith.constant 0 : i32
    %c0_i32_0 = arith.constant 0 : i32
    %c0_i32_1 = arith.constant 0 : i32
    return %c0_i32, %c0_i32_0 : i32, i32
  }
  func.func @transform_6(%arg0: i32) -> (i32, i32) {
    %c0_i32 = arith.constant 0 : i32
    %c0_i32_0 = arith.constant 0 : i32
    %c0_i32_1 = arith.constant 0 : i32
    return %c0_i32, %c0_i32_0 : i32, i32
  }
  func.func @transform_7(%arg0: i32) -> (i32, i32) {
    %c0_i32 = arith.constant 0 : i32
    %c0_i32_0 = arith.constant 0 : i32
    return %arg0, %c0_i32 : i32, i32
  }
}

module attributes {stable_mosaic.version = 11 : i64} {
  func.func @mlp_kernel(%arg0: i32, %arg1: memref<8x32xf32, #tpu.memory_space<vmem>>, %arg2: memref<32x128xbf16, #tpu.memory_space<vmem>>, %arg3: memref<1x128xf32, #tpu.memory_space<vmem>>, %arg4: memref<128x128xbf16, #tpu.memory_space<vmem>>, %arg5: memref<1x128xf32, #tpu.memory_space<vmem>>, %arg6: memref<128x16xbf16, #tpu.memory_space<vmem>>, %arg7: memref<1x16xf32, #tpu.memory_space<vmem>>, %arg8: memref<8x16xf32, #tpu.memory_space<vmem>>) attributes {dimension_semantics = [#tpu.dimension_semantics<parallel>], iteration_bounds = array<i64: 1>, scalar_prefetch = 0 : i64, scratch_operands = 0 : i64, tpu.core_type = #tpu.core_type<tc>, window_params = [{transform_indices = @transform_0, window_bounds = array<i64: 8, 32>}, {pipeline_mode = #tpu.pipeline_mode<synchronous>, transform_indices = @transform_1, window_bounds = array<i64: 32, 128>}, {pipeline_mode = #tpu.pipeline_mode<synchronous>, transform_indices = @transform_2, window_bounds = array<i64: 1, 128>}, {pipeline_mode = #tpu.pipeline_mode<synchronous>, transform_indices = @transform_3, window_bounds = array<i64: 128, 128>}, {pipeline_mode = #tpu.pipeline_mode<synchronous>, transform_indices = @transform_4, window_bounds = array<i64: 1, 128>}, {pipeline_mode = #tpu.pipeline_mode<synchronous>, transform_indices = @transform_5, window_bounds = array<i64: 128, 16>}, {pipeline_mode = #tpu.pipeline_mode<synchronous>, transform_indices = @transform_6, window_bounds = array<i64: 1, 16>}, {transform_indices = @transform_7, window_bounds = array<i64: 8, 16>}]} {
    %c0 = arith.constant 0 : index
    %c0_0 = arith.constant 0 : index
    %0 = vector.load %arg1[%c0, %c0_0] : memref<8x32xf32, #tpu.memory_space<vmem>>, vector<8x32xf32>
    %1 = arith.truncf %0 : vector<8x32xf32> to vector<8x32xbf16>
    %c0_1 = arith.constant 0 : index
    %c0_2 = arith.constant 0 : index
    %2 = vector.load %arg2[%c0_1, %c0_2] : memref<32x128xbf16, #tpu.memory_space<vmem>>, vector<32x128xbf16>
    %cst = arith.constant dense<0.000000e+00> : vector<8x128xf32>
    %3 = tpu.matmul %1, %2, %cst {dimension_numbers = #tpu.dot_dimension_numbers<[1], [0], [0], [1], [0, 0, 1, 1], [], []>} : vector<8x32xbf16>, vector<32x128xbf16>, vector<8x128xf32> -> vector<8x128xf32>
    %c0_3 = arith.constant 0 : index
    %c0_4 = arith.constant 0 : index
    %4 = vector.load %arg3[%c0_3, %c0_4] : memref<1x128xf32, #tpu.memory_space<vmem>>, vector<1x128xf32>
    %5 = vector.broadcast %4 : vector<1x128xf32> to vector<8x128xf32>
    %6 = arith.addf %3, %5 : vector<8x128xf32>
    %cst_5 = arith.constant 0.000000e+00 : f32
    %7 = vector.broadcast %cst_5 : f32 to vector<8x128xf32>
    %8 = arith.maximumf %6, %7 : vector<8x128xf32>
    %9 = arith.truncf %8 : vector<8x128xf32> to vector<8x128xbf16>
    %c0_6 = arith.constant 0 : index
    %c0_7 = arith.constant 0 : index
    %10 = vector.load %arg4[%c0_6, %c0_7] : memref<128x128xbf16, #tpu.memory_space<vmem>>, vector<128x128xbf16>
    %cst_8 = arith.constant dense<0.000000e+00> : vector<8x128xf32>
    %11 = tpu.matmul %9, %10, %cst_8 {dimension_numbers = #tpu.dot_dimension_numbers<[1], [0], [0], [1], [0, 0, 1, 1], [], []>} : vector<8x128xbf16>, vector<128x128xbf16>, vector<8x128xf32> -> vector<8x128xf32>
    %c0_9 = arith.constant 0 : index
    %c0_10 = arith.constant 0 : index
    %12 = vector.load %arg5[%c0_9, %c0_10] : memref<1x128xf32, #tpu.memory_space<vmem>>, vector<1x128xf32>
    %13 = vector.broadcast %12 : vector<1x128xf32> to vector<8x128xf32>
    %14 = arith.addf %11, %13 : vector<8x128xf32>
    %cst_11 = arith.constant 0.000000e+00 : f32
    %15 = vector.broadcast %cst_11 : f32 to vector<8x128xf32>
    %16 = arith.maximumf %14, %15 : vector<8x128xf32>
    %17 = arith.truncf %16 : vector<8x128xf32> to vector<8x128xbf16>
    %c0_12 = arith.constant 0 : index
    %c0_13 = arith.constant 0 : index
    %18 = vector.load %arg6[%c0_12, %c0_13] : memref<128x16xbf16, #tpu.memory_space<vmem>>, vector<128x16xbf16>
    %cst_14 = arith.constant dense<0.000000e+00> : vector<8x16xf32>
    %19 = tpu.matmul %17, %18, %cst_14 {dimension_numbers = #tpu.dot_dimension_numbers<[1], [0], [0], [1], [0, 0, 1, 1], [], []>} : vector<8x128xbf16>, vector<128x16xbf16>, vector<8x16xf32> -> vector<8x16xf32>
    %c0_15 = arith.constant 0 : index
    %c0_16 = arith.constant 0 : index
    %20 = vector.load %arg7[%c0_15, %c0_16] : memref<1x16xf32, #tpu.memory_space<vmem>>, vector<1x16xf32>
    %21 = vector.broadcast %20 : vector<1x16xf32> to vector<8x16xf32>
    %22 = arith.addf %19, %21 : vector<8x16xf32>
    %c0_17 = arith.constant 0 : index
    %c0_18 = arith.constant 0 : index
    %23 = vector.load %arg8[%c0_17, %c0_18] : memref<8x16xf32, #tpu.memory_space<vmem>>, vector<8x16xf32>
    tpu.vector_store %arg8[%c0_17, %c0_18], %22 {strides = array<i32>} : memref<8x16xf32, #tpu.memory_space<vmem>>, vector<8x16xf32>,
    return
  }
  func.func @transform_0(%arg0: i32) -> (i32, i32) {
    %c0_i32 = arith.constant 0 : i32
    %c0_i32_0 = arith.constant 0 : i32
    return %arg0, %c0_i32 : i32, i32
  }
  func.func @transform_1(%arg0: i32) -> (i32, i32) {
    %c0_i32 = arith.constant 0 : i32
    %c0_i32_0 = arith.constant 0 : i32
    %c0_i32_1 = arith.constant 0 : i32
    return %c0_i32, %c0_i32_0 : i32, i32
  }
  func.func @transform_2(%arg0: i32) -> (i32, i32) {
    %c0_i32 = arith.constant 0 : i32
    %c0_i32_0 = arith.constant 0 : i32
    %c0_i32_1 = arith.constant 0 : i32
    return %c0_i32, %c0_i32_0 : i32, i32
  }
  func.func @transform_3(%arg0: i32) -> (i32, i32) {
    %c0_i32 = arith.constant 0 : i32
    %c0_i32_0 = arith.constant 0 : i32
    %c0_i32_1 = arith.constant 0 : i32
    return %c0_i32, %c0_i32_0 : i32, i32
  }
  func.func @transform_4(%arg0: i32) -> (i32, i32) {
    %c0_i32 = arith.constant 0 : i32
    %c0_i32_0 = arith.constant 0 : i32
    %c0_i32_1 = arith.constant 0 : i32
    return %c0_i32, %c0_i32_0 : i32, i32
  }
  func.func @transform_5(%arg0: i32) -> (i32, i32) {
    %c0_i32 = arith.constant 0 : i32
    %c0_i32_0 = arith.constant 0 : i32
    %c0_i32_1 = arith.constant 0 : i32
    return %c0_i32, %c0_i32_0 : i32, i32
  }
  func.func @transform_6(%arg0: i32) -> (i32, i32) {
    %c0_i32 = arith.constant 0 : i32
    %c0_i32_0 = arith.constant 0 : i32
    %c0_i32_1 = arith.constant 0 : i32
    return %c0_i32, %c0_i32_0 : i32, i32
  }
  func.func @transform_7(%arg0: i32) -> (i32, i32) {
    %c0_i32 = arith.constant 0 : i32
    %c0_i32_0 = arith.constant 0 : i32
    return %arg0, %c0_i32 : i32, i32
  }
}

</mosaic_0001>

<llo_original>
// kernel: tpu_custom_call.1
$region0: #{tpu_custom_call.1}
  #allocation0 [shape = 'u32[]', space=smem, size = 0x4, offset = 0x4, fixed_abs, tag = 'smem constant byte address 0x4 - core index']
  #allocation1 [shape = 'u32[72,128]{1,0:T(1,128)}', space=vmem, size = 0x9000, scoped, tag = 'internal scratch']
  %s0 = inlined_call_operand.vmem [shape: f32[8,32], index: 0, kind: input, shape index: {}]
  %s1 = inlined_call_operand.hbm [shape: bf16[32,128], index: 1, kind: input, shape index: {}]
  %s2 = inlined_call_operand.vmem [shape: f32[1,128], index: 2, kind: input, shape index: {}]
  %s3 = inlined_call_operand.vmem [shape: bf16[128,128], index: 3, kind: input, shape index: {}]
  %s4 = inlined_call_operand.vmem [shape: f32[1,128], index: 4, kind: input, shape index: {}]
  %s5 = inlined_call_operand.vmem [shape: bf16[128,16], index: 5, kind: input, shape index: {}]
  %s6 = inlined_call_operand.vmem [shape: f32[1,16], index: 6, kind: input, shape index: {}]
  %s7 = inlined_call_operand.hbm [shape: f32[8,16], index: 7, kind: output, shape index: {}]
  %s8 = sld [smem:[#allocation0]]
  $region42: #{tpu_custom_call.1} parent=0
    _
  %s10 = ssub.s32 1, %s8
  %s11 = scalar_select 0, %s10, %s8
  $region1: #{tpu_custom_call.1} parent=0
    #allocation2 [shape = 'u8[8192]{0}', space=vmem, size = 0x2000, scoped, tag = 'input window, operand 1, single buffered']
    #allocation3 [shape = 's32[1]{0}', space=sflag, size = 0x4, scoped, tag = 'scoped memory for tpu_custom_call.1']
    #allocation4 [shape = 's32[1]{0}', space=sflag, size = 0x4, scoped, tag = 'scoped memory for tpu_custom_call.1']
    #allocation5 [shape = 'u8[4096]{0}', space=vmem, size = 0x1000, scoped, tag = 'output window, operand 0, single buffered']
    %12 = vsyncpa [#allocation3], 0
    %13 = vsyncpa [#allocation4], 0
    // Predicated region
    $region2: #{tpu_custom_call.1} parent=1 // pred_check
      _
    $region3: #{tpu_custom_call.1} parent=1 // pred_check_branch
      %15 = sbr.rel (0) target = $region5
    $region4: #{tpu_custom_call.1} parent=1 // pred_region
      _
    $region5: #{tpu_custom_call.1} parent=1 // pred_fallthru
      _
    // Predicated region
    $region6: #{tpu_custom_call.1} parent=1 // pred_check
      _
    $region7: #{tpu_custom_call.1} parent=1 // pred_check_branch
      %17 = sbr.rel (0) target = $region9
    $region8: #{tpu_custom_call.1} parent=1 // pred_region
      %19 = vsyncadd [#allocation3], 0
      %s20 = sshll.u32 %s1, 4
      %s21 = int_to_ptr.hbm [resolvable:$true] %s20
      %s22 = sshll.u32 [#allocation2], 4
      %s23 = int_to_ptr.vmem [resolvable:$true] %s22
      %28 = dma.hbm_to_vmem [thread:$0]  %s21, 256, %s23, [#allocation3], 64, 64, 4
    $region9: #{tpu_custom_call.1} parent=1 // pred_fallthru
      _
    // Predicated region
    $region10: #{tpu_custom_call.1} parent=1 // pred_check
      _
    $region11: #{tpu_custom_call.1} parent=1 // pred_check_branch
      %30 = sbr.rel (0) target = $region13
    $region12: #{tpu_custom_call.1} parent=1 // pred_region
      _
    $region13: #{tpu_custom_call.1} parent=1 // pred_fallthru
      _
    // Predicated region
    $region14: #{tpu_custom_call.1} parent=1 // pred_check
      _
    $region15: #{tpu_custom_call.1} parent=1 // pred_check_branch
      %32 = sbr.rel (0) target = $region17
    $region16: #{tpu_custom_call.1} parent=1 // pred_region
      _
    $region17: #{tpu_custom_call.1} parent=1 // pred_fallthru
      _
    // Predicated region
    $region18: #{tpu_custom_call.1} parent=1 // pred_check
      _
    $region19: #{tpu_custom_call.1} parent=1 // pred_check_branch
      %34 = sbr.rel (0) target = $region21
    $region20: #{tpu_custom_call.1} parent=1 // pred_region
      _
    $region21: #{tpu_custom_call.1} parent=1 // pred_fallthru
      _
    // Predicated region
    $region22: #{tpu_custom_call.1} parent=1 // pred_check
      _
    $region23: #{tpu_custom_call.1} parent=1 // pred_check_branch
      %36 = sbr.rel (0) target = $region25
    $region24: #{tpu_custom_call.1} parent=1 // pred_region
      _
    $region25: #{tpu_custom_call.1} parent=1 // pred_fallthru
      _
    // Predicated region
    $region26: #{tpu_custom_call.1} parent=1 // pred_check
      _
    $region27: #{tpu_custom_call.1} parent=1 // pred_check_branch
      %38 = sbr.rel (0) target = $region29
    $region28: #{tpu_custom_call.1} parent=1 // pred_region
      _
    $region29: #{tpu_custom_call.1} parent=1 // pred_fallthru
      _
    // Predicated region
    $region30: #{tpu_custom_call.1} parent=1 // pred_check
      _
    $region31: #{tpu_custom_call.1} parent=1 // pred_check_branch
      %40 = sbr.rel (0) target = $region33
    $region32: #{tpu_custom_call.1} parent=1 // pred_region
      %42 = dma.done [#allocation3], 256
    $region33: #{tpu_custom_call.1} parent=1 // pred_fallthru
      _
    %v44 = vld [vmem:[%s0] sm:$0xff]
    %v45 = vpack.c.bf16 %v44, %v44
    %v46 = vld [vmem:[#allocation2] sm:$0xf]
    %v47 = vld [vmem:[#allocation2 + $0x4] sm:$0xf]
    %v48 = vld [vmem:[#allocation2 + $0x8] sm:$0xf]
    %v49 = vld [vmem:[#allocation2 + $0xc] sm:$0xf]
    %v50 = vld [vmem:[%s2] sm:$0x1]
    %v52 = vperm.slane %v50, 0
    %v58 = vunpack.c.l.b16 %v46
    %v59 = vunpack.c.l.b16 %v47
    %v60 = vunpack.c.l.b16 %v48
    %v61 = vunpack.c.l.b16 %v49
    %v62 = vpack.c.b16 %v59, %v58
    %v63 = vpack.c.b16 %v61, %v60
    %vm66 = vcmask 261120
    %v68 = vsel %vm66, %v45, 0
    %70 = vmatpush.bf16.msra.mxu0 0
    %71 = vmatpush.bf16.msra.mxu0 0
    %72 = vmatpush.bf16.msra.mxu0 0
    %73 = vmatpush.bf16.msra.mxu0 0
    %74 = vmatpush.bf16.msra.mxu0 0
    %75 = vmatpush.bf16.msra.mxu0 0
    %76 = vmatpush.bf16.msra.mxu0 %v63
    %77 = vmatpush.bf16.msra.mxu0 %v62
    %78 = vmatmul.bf16.gmra.mxu0 %v68
    %v79 = vpop.f32.mrf.mxu0
    %v80 = vadd.f32 %v52, %v79
    %v81 = vpop.f32.mrf.mxu0
    %82 = vdwg.mxu0
    %v83 = vmax.f32 %v80, 0.0
    %v84 = vpack.c.bf16 %v83, %v83
    %v85 = vld [vmem:[%s3] sm:$0xf]
    %v86 = vld [vmem:[%s3 + $0x4] sm:$0xf]
    %v87 = vld [vmem:[%s3 + $0x8] sm:$0xf]
    %v88 = vld [vmem:[%s3 + $0xc] sm:$0xf]
    %v89 = vld [vmem:[%s3 + $0x10] sm:$0xf]
    %v90 = vld [vmem:[%s3 + $0x14] sm:$0xf]
    %v91 = vld [vmem:[%s3 + $0x18] sm:$0xf]
    %v92 = vld [vmem:[%s3 + $0x1c] sm:$0xf]
    %v93 = vld [vmem:[%s3 + $0x20] sm:$0xf]
    %v94 = vld [vmem:[%s3 + $0x24] sm:$0xf]
    %v95 = vld [vmem:[%s3 + $0x28] sm:$0xf]
    %v96 = vld [vmem:[%s3 + $0x2c] sm:$0xf]
    %v97 = vld [vmem:[%s3 + $0x30] sm:$0xf]
    %v98 = vld [vmem:[%s3 + $0x34] sm:$0xf]
    %v99 = vld [vmem:[%s3 + $0x38] sm:$0xf]
    %v100 = vld [vmem:[%s3 + $0x3c] sm:$0xf]
    %v101 = vld [vmem:[%s4] sm:$0x1]
    %v103 = vperm.slane %v101, 0
    %v121 = vunpack.c.l.b16 %v85
    %v122 = vunpack.c.l.b16 %v86
    %v123 = vunpack.c.l.b16 %v87
    %v124 = vunpack.c.l.b16 %v88
    %v125 = vunpack.c.l.b16 %v89
    %v126 = vunpack.c.l.b16 %v90
    %v127 = vunpack.c.l.b16 %v91
    %v128 = vunpack.c.l.b16 %v92
    %v129 = vunpack.c.l.b16 %v93
    %v130 = vunpack.c.l.b16 %v94
    %v131 = vunpack.c.l.b16 %v95
    %v132 = vunpack.c.l.b16 %v96
    %v133 = vunpack.c.l.b16 %v97
    %v134 = vunpack.c.l.b16 %v98
    %v135 = vunpack.c.l.b16 %v99
    %v136 = vunpack.c.l.b16 %v100
    %v137 = vpack.c.b16 %v122, %v121
    %v138 = vpack.c.b16 %v124, %v123
    %v139 = vpack.c.b16 %v126, %v125
    %v140 = vpack.c.b16 %v128, %v127
    %v141 = vpack.c.b16 %v130, %v129
    %v142 = vpack.c.b16 %v132, %v131
    %v143 = vpack.c.b16 %v134, %v133
    %v144 = vpack.c.b16 %v136, %v135
    %153 = vmatpush.bf16.msra.mxu0 %v144
    %154 = vmatpush.bf16.msra.mxu0 %v143
    %155 = vmatpush.bf16.msra.mxu0 %v142
    %156 = vmatpush.bf16.msra.mxu0 %v141
    %157 = vmatpush.bf16.msra.mxu0 %v140
    %158 = vmatpush.bf16.msra.mxu0 %v139
    %159 = vmatpush.bf16.msra.mxu0 %v138
    %160 = vmatpush.bf16.msra.mxu0 %v137
    %161 = vmatmul.bf16.gmra.mxu0 %v84
    %v162 = vpop.f32.mrf.mxu0
    %v163 = vadd.f32 %v103, %v162
    %v164 = vpop.f32.mrf.mxu0
    %165 = vdwg.mxu0
    %v166 = vmax.f32 %v163, 0.0
    %v167 = vpack.c.bf16 %v166, %v166
    %v168 = vld [vmem:[%s5] sm:$0xf]
    %v169 = vld [vmem:[%s5 + $0x4] sm:$0xf]
    %v170 = vld [vmem:[%s5 + $0x8] sm:$0xf]
    %v171 = vld [vmem:[%s5 + $0xc] sm:$0xf]
    %v172 = vld [vmem:[%s5 + $0x10] sm:$0xf]
    %v173 = vld [vmem:[%s5 + $0x14] sm:$0xf]
    %v174 = vld [vmem:[%s5 + $0x18] sm:$0xf]
    %v175 = vld [vmem:[%s5 + $0x1c] sm:$0xf]
    %v176 = vld [vmem:[%s5 + $0x20] sm:$0xf]
    %v177 = vld [vmem:[%s5 + $0x24] sm:$0xf]
    %v178 = vld [vmem:[%s5 + $0x28] sm:$0xf]
    %v179 = vld [vmem:[%s5 + $0x2c] sm:$0xf]
    %v180 = vld [vmem:[%s5 + $0x30] sm:$0xf]
    %v181 = vld [vmem:[%s5 + $0x34] sm:$0xf]
    %v182 = vld [vmem:[%s5 + $0x38] sm:$0xf]
    %v183 = vld [vmem:[%s5 + $0x3c] sm:$0xf]
    %v184 = vld [vmem:[%s6] sm:$0x1]
    %v186 = vperm.slane %v184, 0
    %v204 = vunpack.c.l.b16 %v168
    %v205 = vunpack.c.l.b16 %v169
    %v206 = vunpack.c.l.b16 %v170
    %v207 = vunpack.c.l.b16 %v171
    %v208 = vunpack.c.l.b16 %v172
    %v209 = vunpack.c.l.b16 %v173
    %v210 = vunpack.c.l.b16 %v174
    %v211 = vunpack.c.l.b16 %v175
    %v212 = vunpack.c.l.b16 %v176
    %v213 = vunpack.c.l.b16 %v177
    %v214 = vunpack.c.l.b16 %v178
    %v215 = vunpack.c.l.b16 %v179
    %v216 = vunpack.c.l.b16 %v180
    %v217 = vunpack.c.l.b16 %v181
    %v218 = vunpack.c.l.b16 %v182
    %v219 = vunpack.c.l.b16 %v183
    %v220 = vpack.c.b16 %v205, %v204
    %v221 = vpack.c.b16 %v207, %v206
    %v222 = vpack.c.b16 %v209, %v208
    %v223 = vpack.c.b16 %v211, %v210
    %v224 = vpack.c.b16 %v213, %v212
    %v225 = vpack.c.b16 %v215, %v214
    %v226 = vpack.c.b16 %v217, %v216
    %v227 = vpack.c.b16 %v219, %v218
    %236 = vmatpush.bf16.msra.mxu0 %v227
    %237 = vmatpush.bf16.msra.mxu0 %v226
    %238 = vmatpush.bf16.msra.mxu0 %v225
    %239 = vmatpush.bf16.msra.mxu0 %v224
    %240 = vmatpush.bf16.msra.mxu0 %v223
    %241 = vmatpush.bf16.msra.mxu0 %v222
    %242 = vmatpush.bf16.msra.mxu0 %v221
    %243 = vmatpush.bf16.msra.mxu0 %v220
    %244 = vmatmul.bf16.gmra.mxu0 %v167
    %v245 = vpop.f32.mrf.mxu0
    %v246 = vadd.f32 %v186, %v245
    %v247 = vpop.f32.mrf.mxu0
    %248 = vdwg.mxu0
    %vm249 = vcmask 130048
    %250 = vst.msk [vmem:[#allocation5] sm:$0xff] %vm249, %v246
    // Predicated region
    $region34: #{tpu_custom_call.1} parent=1 // pred_check
      _
    $region35: #{tpu_custom_call.1} parent=1 // pred_check_branch
      %252 = sbr.rel (0) target = $region37
    $region36: #{tpu_custom_call.1} parent=1 // pred_region
      %254 = vsyncadd [#allocation4], 0
      %s256 = sshll.u32 [#allocation5], 4
      %s257 = int_to_ptr.vmem [resolvable:$true] %s256
      %s258 = sshll.u32 %s7, 4
      %s259 = int_to_ptr.hbm [resolvable:$true] %s258
      %261 = dma.vmem_to_hbm [thread:$0]  %s257, 128, %s259, [#allocation4]
    $region37: #{tpu_custom_call.1} parent=1 // pred_fallthru
      _
    // Predicated region
    $region38: #{tpu_custom_call.1} parent=1 // pred_check
      _
    $region39: #{tpu_custom_call.1} parent=1 // pred_check_branch
      %263 = sbr.rel (0) target = $region41
    $region40: #{tpu_custom_call.1} parent=1 // pred_region
      %265 = dma.done [#allocation4], 128
    $region41: #{tpu_custom_call.1} parent=1 // pred_fallthru
      _
    %266 = vsyncpa [#allocation3], 1
    %267 = vsyncpa [#allocation4], 1

// kernel: tpu_custom_call.1
$region0: #{tpu_custom_call.1}
  #allocation0 [shape = 'u32[]', space=smem, size = 0x4, offset = 0x4, fixed_abs, tag = 'smem constant byte address 0x4 - core index']
  #allocation1 [shape = 'u32[72,128]{1,0:T(1,128)}', space=vmem, size = 0x9000, scoped, tag = 'internal scratch']
  %s0 = inlined_call_operand.vmem [shape: f32[8,32], index: 0, kind: input, shape index: {}]
  %s1 = inlined_call_operand.hbm [shape: bf16[32,128], index: 1, kind: input, shape index: {}]
  %s2 = inlined_call_operand.vmem [shape: f32[1,128], index: 2, kind: input, shape index: {}]
  %s3 = inlined_call_operand.vmem [shape: bf16[128,128], index: 3, kind: input, shape index: {}]
  %s4 = inlined_call_operand.vmem [shape: f32[1,128], index: 4, kind: input, shape index: {}]
  %s5 = inlined_call_operand.vmem [shape: bf16[128,16], index: 5, kind: input, shape index: {}]
  %s6 = inlined_call_operand.vmem [shape: f32[1,16], index: 6, kind: input, shape index: {}]
  %s7 = inlined_call_operand.hbm [shape: f32[8,16], index: 7, kind: output, shape index: {}]
  %s8 = sld [smem:[#allocation0]]
  $region42: #{tpu_custom_call.1} parent=0
    _
  %s10 = ssub.s32 1, %s8
  %s11 = scalar_select 0, %s10, %s8
  $region1: #{tpu_custom_call.1} parent=0
    #allocation2 [shape = 'u8[8192]{0}', space=vmem, size = 0x2000, scoped, tag = 'input window, operand 1, single buffered']
    #allocation3 [shape = 's32[1]{0}', space=sflag, size = 0x4, scoped, tag = 'scoped memory for tpu_custom_call.1']
    #allocation4 [shape = 's32[1]{0}', space=sflag, size = 0x4, scoped, tag = 'scoped memory for tpu_custom_call.1']
    #allocation5 [shape = 'u8[4096]{0}', space=vmem, size = 0x1000, scoped, tag = 'output window, operand 0, single buffered']
    %12 = vsyncpa [#allocation3], 0
    %13 = vsyncpa [#allocation4], 0
    // Predicated region
    $region2: #{tpu_custom_call.1} parent=1 // pred_check
      _
    $region3: #{tpu_custom_call.1} parent=1 // pred_check_branch
      %15 = sbr.rel (0) target = $region5
    $region4: #{tpu_custom_call.1} parent=1 // pred_region
      _
    $region5: #{tpu_custom_call.1} parent=1 // pred_fallthru
      _
    // Predicated region
    $region6: #{tpu_custom_call.1} parent=1 // pred_check
      _
    $region7: #{tpu_custom_call.1} parent=1 // pred_check_branch
      %17 = sbr.rel (0) target = $region9
    $region8: #{tpu_custom_call.1} parent=1 // pred_region
      %19 = vsyncadd [#allocation3], 0
      %s20 = sshll.u32 %s1, 4
      %s21 = int_to_ptr.hbm [resolvable:$true] %s20
      %s22 = sshll.u32 [#allocation2], 4
      %s23 = int_to_ptr.vmem [resolvable:$true] %s22
      %28 = dma.hbm_to_vmem [thread:$0]  %s21, 256, %s23, [#allocation3], 64, 64, 4
    $region9: #{tpu_custom_call.1} parent=1 // pred_fallthru
      _
    // Predicated region
    $region10: #{tpu_custom_call.1} parent=1 // pred_check
      _
    $region11: #{tpu_custom_call.1} parent=1 // pred_check_branch
      %30 = sbr.rel (0) target = $region13
    $region12: #{tpu_custom_call.1} parent=1 // pred_region
      _
    $region13: #{tpu_custom_call.1} parent=1 // pred_fallthru
      _
    // Predicated region
    $region14: #{tpu_custom_call.1} parent=1 // pred_check
      _
    $region15: #{tpu_custom_call.1} parent=1 // pred_check_branch
      %32 = sbr.rel (0) target = $region17
    $region16: #{tpu_custom_call.1} parent=1 // pred_region
      _
    $region17: #{tpu_custom_call.1} parent=1 // pred_fallthru
      _
    // Predicated region
    $region18: #{tpu_custom_call.1} parent=1 // pred_check
      _
    $region19: #{tpu_custom_call.1} parent=1 // pred_check_branch
      %34 = sbr.rel (0) target = $region21
    $region20: #{tpu_custom_call.1} parent=1 // pred_region
      _
    $region21: #{tpu_custom_call.1} parent=1 // pred_fallthru
      _
    // Predicated region
    $region22: #{tpu_custom_call.1} parent=1 // pred_check
      _
    $region23: #{tpu_custom_call.1} parent=1 // pred_check_branch
      %36 = sbr.rel (0) target = $region25
    $region24: #{tpu_custom_call.1} parent=1 // pred_region
      _
    $region25: #{tpu_custom_call.1} parent=1 // pred_fallthru
      _
    // Predicated region
    $region26: #{tpu_custom_call.1} parent=1 // pred_check
      _
    $region27: #{tpu_custom_call.1} parent=1 // pred_check_branch
      %38 = sbr.rel (0) target = $region29
    $region28: #{tpu_custom_call.1} parent=1 // pred_region
      _
    $region29: #{tpu_custom_call.1} parent=1 // pred_fallthru
      _
    // Predicated region
    $region30: #{tpu_custom_call.1} parent=1 // pred_check
      _
    $region31: #{tpu_custom_call.1} parent=1 // pred_check_branch
      %40 = sbr.rel (0) target = $region33
    $region32: #{tpu_custom_call.1} parent=1 // pred_region
      %42 = dma.done [#allocation3], 256
    $region33: #{tpu_custom_call.1} parent=1 // pred_fallthru
      _
    %v44 = vld [vmem:[%s0] sm:$0xff]
    %v45 = vpack.c.bf16 %v44, %v44
    %v46 = vld [vmem:[#allocation2] sm:$0xf]
    %v47 = vld [vmem:[#allocation2 + $0x4] sm:$0xf]
    %v48 = vld [vmem:[#allocation2 + $0x8] sm:$0xf]
    %v49 = vld [vmem:[#allocation2 + $0xc] sm:$0xf]
    %v50 = vld [vmem:[%s2] sm:$0x1]
    %v52 = vperm.slane %v50, 0
    %v58 = vunpack.c.l.b16 %v46
    %v59 = vunpack.c.l.b16 %v47
    %v60 = vunpack.c.l.b16 %v48
    %v61 = vunpack.c.l.b16 %v49
    %v62 = vpack.c.b16 %v59, %v58
    %v63 = vpack.c.b16 %v61, %v60
    %vm66 = vcmask 261120
    %v68 = vsel %vm66, %v45, 0
    %70 = vmatpush.bf16.msra.mxu0 0
    %71 = vmatpush.bf16.msra.mxu0 0
    %72 = vmatpush.bf16.msra.mxu0 0
    %73 = vmatpush.bf16.msra.mxu0 0
    %74 = vmatpush.bf16.msra.mxu0 0
    %75 = vmatpush.bf16.msra.mxu0 0
    %76 = vmatpush.bf16.msra.mxu0 %v63
    %77 = vmatpush.bf16.msra.mxu0 %v62
    %78 = vmatmul.bf16.gmra.mxu0 %v68
    %v79 = vpop.f32.mrf.mxu0
    %v80 = vadd.f32 %v52, %v79
    %v81 = vpop.f32.mrf.mxu0
    %82 = vdwg.mxu0
    %v83 = vmax.f32 %v80, 0.0
    %v84 = vpack.c.bf16 %v83, %v83
    %v85 = vld [vmem:[%s3] sm:$0xf]
    %v86 = vld [vmem:[%s3 + $0x4] sm:$0xf]
    %v87 = vld [vmem:[%s3 + $0x8] sm:$0xf]
    %v88 = vld [vmem:[%s3 + $0xc] sm:$0xf]
    %v89 = vld [vmem:[%s3 + $0x10] sm:$0xf]
    %v90 = vld [vmem:[%s3 + $0x14] sm:$0xf]
    %v91 = vld [vmem:[%s3 + $0x18] sm:$0xf]
    %v92 = vld [vmem:[%s3 + $0x1c] sm:$0xf]
    %v93 = vld [vmem:[%s3 + $0x20] sm:$0xf]
    %v94 = vld [vmem:[%s3 + $0x24] sm:$0xf]
    %v95 = vld [vmem:[%s3 + $0x28] sm:$0xf]
    %v96 = vld [vmem:[%s3 + $0x2c] sm:$0xf]
    %v97 = vld [vmem:[%s3 + $0x30] sm:$0xf]
    %v98 = vld [vmem:[%s3 + $0x34] sm:$0xf]
    %v99 = vld [vmem:[%s3 + $0x38] sm:$0xf]
    %v100 = vld [vmem:[%s3 + $0x3c] sm:$0xf]
    %v101 = vld [vmem:[%s4] sm:$0x1]
    %v103 = vperm.slane %v101, 0
    %v121 = vunpack.c.l.b16 %v85
    %v122 = vunpack.c.l.b16 %v86
    %v123 = vunpack.c.l.b16 %v87
    %v124 = vunpack.c.l.b16 %v88
    %v125 = vunpack.c.l.b16 %v89
    %v126 = vunpack.c.l.b16 %v90
    %v127 = vunpack.c.l.b16 %v91
    %v128 = vunpack.c.l.b16 %v92
    %v129 = vunpack.c.l.b16 %v93
    %v130 = vunpack.c.l.b16 %v94
    %v131 = vunpack.c.l.b16 %v95
    %v132 = vunpack.c.l.b16 %v96
    %v133 = vunpack.c.l.b16 %v97
    %v134 = vunpack.c.l.b16 %v98
    %v135 = vunpack.c.l.b16 %v99
    %v136 = vunpack.c.l.b16 %v100
    %v137 = vpack.c.b16 %v122, %v121
    %v138 = vpack.c.b16 %v124, %v123
    %v139 = vpack.c.b16 %v126, %v125
    %v140 = vpack.c.b16 %v128, %v127
    %v141 = vpack.c.b16 %v130, %v129
    %v142 = vpack.c.b16 %v132, %v131
    %v143 = vpack.c.b16 %v134, %v133
    %v144 = vpack.c.b16 %v136, %v135
    %153 = vmatpush.bf16.msra.mxu0 %v144
    %154 = vmatpush.bf16.msra.mxu0 %v143
    %155 = vmatpush.bf16.msra.mxu0 %v142
    %156 = vmatpush.bf16.msra.mxu0 %v141
    %157 = vmatpush.bf16.msra.mxu0 %v140
    %158 = vmatpush.bf16.msra.mxu0 %v139
    %159 = vmatpush.bf16.msra.mxu0 %v138
    %160 = vmatpush.bf16.msra.mxu0 %v137
    %161 = vmatmul.bf16.gmra.mxu0 %v84
    %v162 = vpop.f32.mrf.mxu0
    %v163 = vadd.f32 %v103, %v162
    %v164 = vpop.f32.mrf.mxu0
    %165 = vdwg.mxu0
    %v166 = vmax.f32 %v163, 0.0
    %v167 = vpack.c.bf16 %v166, %v166
    %v168 = vld [vmem:[%s5] sm:$0xf]
    %v169 = vld [vmem:[%s5 + $0x4] sm:$0xf]
    %v170 = vld [vmem:[%s5 + $0x8] sm:$0xf]
    %v171 = vld [vmem:[%s5 + $0xc] sm:$0xf]
    %v172 = vld [vmem:[%s5 + $0x10] sm:$0xf]
    %v173 = vld [vmem:[%s5 + $0x14] sm:$0xf]
    %v174 = vld [vmem:[%s5 + $0x18] sm:$0xf]
    %v175 = vld [vmem:[%s5 + $0x1c] sm:$0xf]
    %v176 = vld [vmem:[%s5 + $0x20] sm:$0xf]
    %v177 = vld [vmem:[%s5 + $0x24] sm:$0xf]
    %v178 = vld [vmem:[%s5 + $0x28] sm:$0xf]
    %v179 = vld [vmem:[%s5 + $0x2c] sm:$0xf]
    %v180 = vld [vmem:[%s5 + $0x30] sm:$0xf]
    %v181 = vld [vmem:[%s5 + $0x34] sm:$0xf]
    %v182 = vld [vmem:[%s5 + $0x38] sm:$0xf]
    %v183 = vld [vmem:[%s5 + $0x3c] sm:$0xf]
    %v184 = vld [vmem:[%s6] sm:$0x1]
    %v186 = vperm.slane %v184, 0
    %v204 = vunpack.c.l.b16 %v168
    %v205 = vunpack.c.l.b16 %v169
    %v206 = vunpack.c.l.b16 %v170
    %v207 = vunpack.c.l.b16 %v171
    %v208 = vunpack.c.l.b16 %v172
    %v209 = vunpack.c.l.b16 %v173
    %v210 = vunpack.c.l.b16 %v174
    %v211 = vunpack.c.l.b16 %v175
    %v212 = vunpack.c.l.b16 %v176
    %v213 = vunpack.c.l.b16 %v177
    %v214 = vunpack.c.l.b16 %v178
    %v215 = vunpack.c.l.b16 %v179
    %v216 = vunpack.c.l.b16 %v180
    %v217 = vunpack.c.l.b16 %v181
    %v218 = vunpack.c.l.b16 %v182
    %v219 = vunpack.c.l.b16 %v183
    %v220 = vpack.c.b16 %v205, %v204
    %v221 = vpack.c.b16 %v207, %v206
    %v222 = vpack.c.b16 %v209, %v208
    %v223 = vpack.c.b16 %v211, %v210
    %v224 = vpack.c.b16 %v213, %v212
    %v225 = vpack.c.b16 %v215, %v214
    %v226 = vpack.c.b16 %v217, %v216
    %v227 = vpack.c.b16 %v219, %v218
    %236 = vmatpush.bf16.msra.mxu0 %v227
    %237 = vmatpush.bf16.msra.mxu0 %v226
    %238 = vmatpush.bf16.msra.mxu0 %v225
    %239 = vmatpush.bf16.msra.mxu0 %v224
    %240 = vmatpush.bf16.msra.mxu0 %v223
    %241 = vmatpush.bf16.msra.mxu0 %v222
    %242 = vmatpush.bf16.msra.mxu0 %v221
    %243 = vmatpush.bf16.msra.mxu0 %v220
    %244 = vmatmul.bf16.gmra.mxu0 %v167
    %v245 = vpop.f32.mrf.mxu0
    %v246 = vadd.f32 %v186, %v245
    %v247 = vpop.f32.mrf.mxu0
    %248 = vdwg.mxu0
    %vm249 = vcmask 130048
    %250 = vst.msk [vmem:[#allocation5] sm:$0xff] %vm249, %v246
    // Predicated region
    $region34: #{tpu_custom_call.1} parent=1 // pred_check
      _
    $region35: #{tpu_custom_call.1} parent=1 // pred_check_branch
      %252 = sbr.rel (0) target = $region37
    $region36: #{tpu_custom_call.1} parent=1 // pred_region
      %254 = vsyncadd [#allocation4], 0
      %s256 = sshll.u32 [#allocation5], 4
      %s257 = int_to_ptr.vmem [resolvable:$true] %s256
      %s258 = sshll.u32 %s7, 4
      %s259 = int_to_ptr.hbm [resolvable:$true] %s258
      %261 = dma.vmem_to_hbm [thread:$0]  %s257, 128, %s259, [#allocation4]
    $region37: #{tpu_custom_call.1} parent=1 // pred_fallthru
      _
    // Predicated region
    $region38: #{tpu_custom_call.1} parent=1 // pred_check
      _
    $region39: #{tpu_custom_call.1} parent=1 // pred_check_branch
      %263 = sbr.rel (0) target = $region41
    $region40: #{tpu_custom_call.1} parent=1 // pred_region
      %265 = dma.done [#allocation4], 128
    $region41: #{tpu_custom_call.1} parent=1 // pred_fallthru
      _
    %266 = vsyncpa [#allocation3], 1
    %267 = vsyncpa [#allocation4], 1

</llo_original>
